<compile_context>
chip_gen: v7x
topology: tpu7x:2x2x1
jax: 0.10.0
libtpu: 0.0.40
codegen_flags: <defaults>
</compile_context>

<pallas_src>
import jax
import jax.numpy as jnp
from jax.experimental import pallas as pl
from jax.experimental.pallas import tpu as pltpu


def _round_up(x: int, m: int) -> int:
    return (x + m - 1) // m * m


def _mlp_kernel(x_ref, w1_ref, w2_ref, o_ref, acc_ref):
    # x_ref:  (tm, H)   input tile (native dtype, e.g. bf16)
    # w1_ref: (H, tn)   w1^T tile for this ffn slice
    # w2_ref: (tn, H)   w2^T tile for this ffn slice
    # o_ref:  (tm, H)   output tile (resident across the ffn grid axis)
    # acc_ref:(tm, H)   f32 accumulator scratch
    j = pl.program_id(1)

    @pl.when(j == 0)
    def _():
        acc_ref[...] = jnp.zeros_like(acc_ref)

    # First projection: native-dtype operands on the MXU, f32 accumulation.
    h = jnp.dot(x_ref[...], w1_ref[...], preferred_element_type=jnp.float32)
    # SiLU in f32 (VPU/EUP fast path); elementwise over ffn, so per-tile is exact.
    h = h * jax.nn.sigmoid(h)
    # Second projection: cast down only at the MXU input; accumulate over ffn tiles.
    acc_ref[...] += jnp.dot(
        h.astype(w2_ref.dtype), w2_ref[...], preferred_element_type=jnp.float32
    )

    @pl.when(j == pl.num_programs(1) - 1)
    def _():
        o_ref[...] = acc_ref[...].astype(o_ref.dtype)


def mlp_pallas(hidden_states, w1t, w2t, *, tm=256, tn=512):
    """hidden_states: (batch, seq, hidden); w1t: (hidden, ffn); w2t: (ffn, hidden).

    Defaults (tm=256, tn=512) target v6e/v7x; on v5e tm=512 is a good choice.
    Small inputs are handled by shrinking tiles / zero-padding (zero rows/cols
    contribute nothing through silu + matmul, and padding is sliced off).
    """
    batch, seq, hidden = hidden_states.shape
    hidden_w, ffn = w1t.shape
    assert hidden_w == hidden and w2t.shape == (ffn, hidden)
    dtype = hidden_states.dtype

    M = batch * seq
    # Adapt tiles to small problems while keeping (8, 128) alignment.
    tm_eff = min(tm, _round_up(M, 8))
    tn_eff = min(tn, _round_up(ffn, 128))
    M_pad = _round_up(M, tm_eff)
    H_pad = _round_up(hidden, 128)
    F_pad = _round_up(ffn, tn_eff)

    x2d = hidden_states.reshape(M, hidden)
    if (M_pad, H_pad) != (M, hidden):
        x2d = jnp.pad(x2d, ((0, M_pad - M), (0, H_pad - hidden)))
    w1p = w1t
    if (H_pad, F_pad) != (hidden, ffn):
        w1p = jnp.pad(w1t, ((0, H_pad - hidden), (0, F_pad - ffn)))
    w2p = w2t
    if (F_pad, H_pad) != (ffn, hidden):
        w2p = jnp.pad(w2t, ((0, F_pad - ffn), (0, H_pad - hidden)))

    grid = (M_pad // tm_eff, F_pad // tn_eff)

    itemsize = jnp.dtype(dtype).itemsize
    cost = pl.CostEstimate(
        flops=4 * M_pad * H_pad * F_pad,          # two matmuls
        transcendentals=M_pad * F_pad,            # sigmoid in SiLU
        bytes_accessed=(
            M_pad * H_pad * itemsize              # x
            + H_pad * F_pad * w1p.dtype.itemsize  # w1
            + F_pad * H_pad * w2p.dtype.itemsize  # w2
            + M_pad * H_pad * itemsize            # out
        ),
    )

    out2d = pl.pallas_call(
        _mlp_kernel,
        out_shape=jax.ShapeDtypeStruct((M_pad, H_pad), dtype),
        grid_spec=pltpu.PrefetchScalarGridSpec(
            num_scalar_prefetch=0,
            grid=grid,
            in_specs=[
                pl.BlockSpec((tm_eff, H_pad), lambda i, j: (i, 0)),   # x tile
                pl.BlockSpec((H_pad, tn_eff), lambda i, j: (0, j)),   # w1^T ffn slice
                pl.BlockSpec((tn_eff, H_pad), lambda i, j: (j, 0)),   # w2^T ffn slice
            ],
            out_specs=pl.BlockSpec((tm_eff, H_pad), lambda i, j: (i, 0)),
            scratch_shapes=[pltpu.VMEM((tm_eff, H_pad), jnp.float32)],
        ),
        compiler_params=pltpu.CompilerParams(
            dimension_semantics=("parallel", "arbitrary"),
            vmem_limit_bytes=64 * 1024 * 1024,   # safe on v7x (64 MiB); raise on v5e/v6e for larger tiles
        ),
        cost_estimate=cost,
    )(x2d, w1p, w2p)

    out2d = out2d[:M, :hidden]
    return out2d.reshape(batch, seq, hidden)


def mlp_reference(hidden_states, w1t, w2t):
    x = hidden_states.astype(jnp.float32)
    h = x @ w1t.astype(jnp.float32)
    h = h * jax.nn.sigmoid(h)
    out = h @ w2t.astype(jnp.float32)
    return out


if __name__ == "__main__":
    # Small shapes consistent with the module; hidden/ffn chosen lane-dense (x128).
    batch, seq, hidden, ffn = 2, 16, 256, 512

    key = jax.random.PRNGKey(0)
    k_x, k_w1, k_w2 = jax.random.split(key, 3)

    x_f32 = jax.random.normal(k_x, (batch, seq, hidden), dtype=jnp.float32)
    # nn.Linear weights: w1.weight (ffn, hidden), w2.weight (hidden, ffn); store transposed.
    w1 = jax.random.normal(k_w1, (ffn, hidden), dtype=jnp.float32) * 0.05
    w2 = jax.random.normal(k_w2, (hidden, ffn), dtype=jnp.float32) * 0.05
    w1t_f32 = w1.T  # (hidden, ffn)
    w2t_f32 = w2.T  # (ffn, hidden)

    # --- f32 path: tight numerical check ---
    out_f32 = jax.block_until_ready(mlp_pallas(x_f32, w1t_f32, w2t_f32))
    ref = mlp_reference(x_f32, w1t_f32, w2t_f32)
    assert out_f32.shape == (batch, seq, hidden)
    assert jnp.allclose(out_f32.astype(jnp.float32), ref, atol=1e-4, rtol=1e-4), \
        "f32 mismatch vs reference"

    # --- bf16 path: exercises native-dtype MXU matmuls with f32 accumulation ---
    x_bf16 = x_f32.astype(jnp.bfloat16)
    w1t_bf16 = w1t_f32.astype(jnp.bfloat16)
    w2t_bf16 = w2t_f32.astype(jnp.bfloat16)
    out_bf16 = jax.block_until_ready(mlp_pallas(x_bf16, w1t_bf16, w2t_bf16))
    ref_bf16 = mlp_reference(x_bf16, w1t_bf16, w2t_bf16)
    assert out_bf16.shape == (batch, seq, hidden)
    assert jnp.allclose(out_bf16.astype(jnp.float32), ref_bf16, atol=5e-2, rtol=5e-2), \
        "bf16 mismatch vs reference"

    print("KERNEL_OK")
</pallas_src>

<mosaic_0001>
module attributes {stable_mosaic.version = 11 : i64} {
  func.func @_mlp_kernel(%arg0: i32, %arg1: i32, %arg2: memref<32x256xf32, #tpu.memory_space<vmem>>, %arg3: memref<256x512xf32, #tpu.memory_space<vmem>>, %arg4: memref<512x256xf32, #tpu.memory_space<vmem>>, %arg5: memref<32x256xf32, #tpu.memory_space<vmem>>, %arg6: memref<32x256xf32, #tpu.memory_space<vmem>>) attributes {dimension_semantics = [#tpu.dimension_semantics<parallel>, #tpu.dimension_semantics<arbitrary>], iteration_bounds = array<i64: 1, 1>, scalar_prefetch = 0 : i64, scratch_operands = 1 : i64, tpu.core_type = #tpu.core_type<tc>, window_params = [{transform_indices = @transform_0, window_bounds = array<i64: 32, 256>}, {transform_indices = @transform_1, window_bounds = array<i64: 256, 512>}, {transform_indices = @transform_2, window_bounds = array<i64: 512, 256>}, {transform_indices = @transform_3, window_bounds = array<i64: 32, 256>}]} {
    %c0_i32 = arith.constant 0 : i32
    %0 = arith.cmpi eq, %arg1, %c0_i32 : i32
    %1 = arith.extui %0 : i1 to i32
    %c0_i32_0 = arith.constant 0 : i32
    %2 = arith.cmpi ne, %1, %c0_i32_0 : i32
    scf.if %2 {
      %cst_14 = arith.constant 0.000000e+00 : f32
      %20 = vector.broadcast %cst_14 : f32 to vector<32x256xf32>
      %c0_15 = arith.constant 0 : index
      %c0_16 = arith.constant 0 : index
      %21 = vector.load %arg6[%c0_15, %c0_16] : memref<32x256xf32, #tpu.memory_space<vmem>>, vector<32x256xf32>
      tpu.vector_store %arg6[%c0_15, %c0_16], %20 {strides = array<i32>} : memref<32x256xf32, #tpu.memory_space<vmem>>, vector<32x256xf32>,
    } else {
    }
    %c0 = arith.constant 0 : index
    %c0_1 = arith.constant 0 : index
    %3 = vector.load %arg2[%c0, %c0_1] : memref<32x256xf32, #tpu.memory_space<vmem>>, vector<32x256xf32>
    %c0_2 = arith.constant 0 : index
    %c0_3 = arith.constant 0 : index
    %4 = vector.load %arg3[%c0_2, %c0_3] : memref<256x512xf32, #tpu.memory_space<vmem>>, vector<256x512xf32>
    %cst = arith.constant dense<0.000000e+00> : vector<32x512xf32>
    %5 = tpu.matmul %3, %4, %cst {dimension_numbers = #tpu.dot_dimension_numbers<[1], [0], [0], [1], [0, 0, 1, 1], [], []>} : vector<32x256xf32>, vector<256x512xf32>, vector<32x512xf32> -> vector<32x512xf32>
    %6 = arith.negf %5 : vector<32x512xf32>
    %7 = math.exp %6 : vector<32x512xf32>
    %cst_4 = arith.constant 1.000000e+00 : f32
    %8 = vector.broadcast %cst_4 : f32 to vector<32x512xf32>
    %9 = arith.addf %8, %7 : vector<32x512xf32>
    %10 = arith.divf %8, %9 : vector<32x512xf32>
    %11 = arith.mulf %5, %10 : vector<32x512xf32>
    %c0_5 = arith.constant 0 : index
    %c0_6 = arith.constant 0 : index
    %12 = vector.load %arg6[%c0_5, %c0_6] : memref<32x256xf32, #tpu.memory_space<vmem>>, vector<32x256xf32>
    %c0_7 = arith.constant 0 : index
    %c0_8 = arith.constant 0 : index
    %13 = vector.load %arg4[%c0_7, %c0_8] : memref<512x256xf32, #tpu.memory_space<vmem>>, vector<512x256xf32>
    %cst_9 = arith.constant dense<0.000000e+00> : vector<32x256xf32>
    %14 = tpu.matmul %11, %13, %cst_9 {dimension_numbers = #tpu.dot_dimension_numbers<[1], [0], [0], [1], [0, 0, 1, 1], [], []>} : vector<32x512xf32>, vector<512x256xf32>, vector<32x256xf32> -> vector<32x256xf32>
    %15 = arith.addf %12, %14 : vector<32x256xf32>
    %c0_10 = arith.constant 0 : index
    %c0_11 = arith.constant 0 : index
    %16 = vector.load %arg6[%c0_10, %c0_11] : memref<32x256xf32, #tpu.memory_space<vmem>>, vector<32x256xf32>
    tpu.vector_store %arg6[%c0_10, %c0_11], %15 {strides = array<i32>} : memref<32x256xf32, #tpu.memory_space<vmem>>, vector<32x256xf32>,
    %c0_i32_12 = arith.constant 0 : i32
    %17 = arith.cmpi eq, %arg1, %c0_i32_12 : i32
    %18 = arith.extui %17 : i1 to i32
    %c0_i32_13 = arith.constant 0 : i32
    %19 = arith.cmpi ne, %18, %c0_i32_13 : i32
    scf.if %19 {
      %c0_14 = arith.constant 0 : index
      %c0_15 = arith.constant 0 : index
      %20 = vector.load %arg6[%c0_14, %c0_15] : memref<32x256xf32, #tpu.memory_space<vmem>>, vector<32x256xf32>
      %c0_16 = arith.constant 0 : index
      %c0_17 = arith.constant 0 : index
      %21 = vector.load %arg5[%c0_16, %c0_17] : memref<32x256xf32, #tpu.memory_space<vmem>>, vector<32x256xf32>
      tpu.vector_store %arg5[%c0_16, %c0_17], %20 {strides = array<i32>} : memref<32x256xf32, #tpu.memory_space<vmem>>, vector<32x256xf32>,
    } else {
    }
    return
  }
  func.func @transform_0(%arg0: i32, %arg1: i32) -> (i32, i32) {
    %c0_i32 = arith.constant 0 : i32
    %c0_i32_0 = arith.constant 0 : i32
    return %arg0, %c0_i32 : i32, i32
  }
  func.func @transform_1(%arg0: i32, %arg1: i32) -> (i32, i32) {
    %c0_i32 = arith.constant 0 : i32
    %c0_i32_0 = arith.constant 0 : i32
    return %c0_i32, %arg1 : i32, i32
  }
  func.func @transform_2(%arg0: i32, %arg1: i32) -> (i32, i32) {
    %c0_i32 = arith.constant 0 : i32
    %c0_i32_0 = arith.constant 0 : i32
    return %arg1, %c0_i32 : i32, i32
  }
  func.func @transform_3(%arg0: i32, %arg1: i32) -> (i32, i32) {
    %c0_i32 = arith.constant 0 : i32
    %c0_i32_0 = arith.constant 0 : i32
    return %arg0, %c0_i32 : i32, i32
  }
}

</mosaic_0001>

<llo_original>
// kernel: tpu_custom_call.1
$region0: #{tpu_custom_call.1}
  #allocation0 [shape = 'u32[]', space=smem, size = 0x4, offset = 0x4, fixed_abs, tag = 'smem constant byte address 0x4 - core index']
  #allocation1 [shape = 'u32[144,128]{1,0:T(1,128)}', space=vmem, size = 0x12000, scoped, tag = 'internal scratch']
  #allocation2 [shape = 'f32[32,256]{1,0:T(8,128)}', space=vmem, size = 0x8000, scoped, tag = 'scratch operand']
  %s0 = inlined_call_operand.hbm [shape: f32[32,256], index: 0, kind: input, shape index: {}]
  %s1 = inlined_call_operand.hbm [shape: f32[256,512], index: 1, kind: input, shape index: {}]
  %s2 = inlined_call_operand.hbm [shape: f32[512,256], index: 2, kind: input, shape index: {}]
  %s3 = inlined_call_operand.hbm [shape: f32[32,256], index: 3, kind: output, shape index: {}]
  %s4 = sld [smem:[#allocation0]]
  $region42: #{tpu_custom_call.1} parent=0
    _
  %s6 = ssub.s32 1, %s4
  %s7 = scalar_select 0, %s6, %s4
  $region1: #{tpu_custom_call.1} parent=0
    #allocation3 [shape = 'u8[32768]{0}', space=vmem, size = 0x8000, scoped, tag = 'input window, operand 0, single buffered']
    #allocation4 [shape = 's32[1]{0}', space=sflag, size = 0x4, scoped, tag = 'scoped memory for tpu_custom_call.1']
    #allocation5 [shape = 's32[1]{0}', space=sflag, size = 0x4, scoped, tag = 'scoped memory for tpu_custom_call.1']
    #allocation6 [shape = 'u8[524288]{0}', space=vmem, size = 0x80000, scoped, tag = 'input window, operand 1, single buffered']
    #allocation7 [shape = 's32[1]{0}', space=sflag, size = 0x4, scoped, tag = 'scoped memory for tpu_custom_call.1']
    #allocation8 [shape = 'u8[524288]{0}', space=vmem, size = 0x80000, scoped, tag = 'input window, operand 2, single buffered']
    #allocation9 [shape = 'u8[32768]{0}', space=vmem, size = 0x8000, scoped, tag = 'output window, operand 0, single buffered']
    %8 = vsyncpa [#allocation4], 0
    %9 = vsyncpa [#allocation7], 0
    %10 = vsyncpa [#allocation5], 0
    // Predicated region
    $region2: #{tpu_custom_call.1} parent=1 // pred_check
      _
    $region3: #{tpu_custom_call.1} parent=1 // pred_check_branch
      %12 = sbr.rel (0) target = $region5
    $region4: #{tpu_custom_call.1} parent=1 // pred_region
      %s14 = ssub.s32 1024, 1024
      %15 = vsyncadd [#allocation4], %s14
      %s16 = sshll.u32 [#allocation3], 4
      %s17 = int_to_ptr.vmem [resolvable:$true] %s16
      %22 = dma.hbm_to_vmem [thread:$0]  %s0, 1024, %s17, [#allocation4], 256, 256, 16
    $region5: #{tpu_custom_call.1} parent=1 // pred_fallthru
      _
    // Predicated region
    $region6: #{tpu_custom_call.1} parent=1 // pred_check
      _
    $region7: #{tpu_custom_call.1} parent=1 // pred_check_branch
      %24 = sbr.rel (0) target = $region9
    $region8: #{tpu_custom_call.1} parent=1 // pred_region
      %s26 = ssub.s32 16384, 16384
      %27 = vsyncadd [#allocation7], %s26
      %s28 = sshll.u32 [#allocation6], 4
      %s29 = int_to_ptr.vmem [resolvable:$true] %s28
      %34 = dma.hbm_to_vmem [thread:$0]  %s1, 16384, %s29, [#allocation7], 512, 512, 32
    $region9: #{tpu_custom_call.1} parent=1 // pred_fallthru
      _
    // Predicated region
    $region10: #{tpu_custom_call.1} parent=1 // pred_check
      _
    $region11: #{tpu_custom_call.1} parent=1 // pred_check_branch
      %36 = sbr.rel (0) target = $region13
    $region12: #{tpu_custom_call.1} parent=1 // pred_region
      %s38 = ssub.s32 16384, 16384
      %39 = vsyncadd [#allocation7], %s38
      %s40 = sshll.u32 [#allocation8], 4
      %s41 = int_to_ptr.vmem [resolvable:$true] %s40
      %46 = dma.hbm_to_vmem [thread:$0]  %s2, 16384, %s41, [#allocation7], 256, 256, 16
    $region13: #{tpu_custom_call.1} parent=1 // pred_fallthru
      _
    // Predicated region
    $region14: #{tpu_custom_call.1} parent=1 // pred_check
      _
    $region15: #{tpu_custom_call.1} parent=1 // pred_check_branch
      %48 = sbr.rel (0) target = $region17
    $region16: #{tpu_custom_call.1} parent=1 // pred_region
      %49 = dma.done [#allocation4], 1024
    $region17: #{tpu_custom_call.1} parent=1 // pred_fallthru
      _
    // Predicated region
    $region18: #{tpu_custom_call.1} parent=1 // pred_check
      _
    $region19: #{tpu_custom_call.1} parent=1 // pred_check_branch
      %51 = sbr.rel (0) target = $region21
    $region20: #{tpu_custom_call.1} parent=1 // pred_region
      %52 = dma.done [#allocation7], 16384
    $region21: #{tpu_custom_call.1} parent=1 // pred_fallthru
      _
    // Predicated region
    $region22: #{tpu_custom_call.1} parent=1 // pred_check
      _
    $region23: #{tpu_custom_call.1} parent=1 // pred_check_branch
      %54 = sbr.rel (0) target = $region25
    $region24: #{tpu_custom_call.1} parent=1 // pred_region
      %55 = dma.done [#allocation7], 16384
    $region25: #{tpu_custom_call.1} parent=1 // pred_fallthru
      _
    %p56 = scmp.eq.s32.totalorder 0, 0
    // Predicated region
    $region26: #{tpu_custom_call.1} parent=1 // pred_check
      %p57 = pneg %p56
    $region27: #{tpu_custom_call.1} parent=1 // pred_check_branch
      %59 = sbr.rel (%p57) target = $region29
    $region28: #{tpu_custom_call.1} parent=1 // pred_region
      %60 = vst [vmem:[#allocation2] sm:$0xff] 0.0
      %61 = vst [vmem:[#allocation2 + $0x8] sm:$0xff] 0.0
      %62 = vst [vmem:[#allocation2 + $0x10] sm:$0xff] 0.0
      %63 = vst [vmem:[#allocation2 + $0x18] sm:$0xff] 0.0
      %64 = vst [vmem:[#allocation2 + $0x20] sm:$0xff] 0.0
      %65 = vst [vmem:[#allocation2 + $0x28] sm:$0xff] 0.0
      %66 = vst [vmem:[#allocation2 + $0x30] sm:$0xff] 0.0
      %67 = vst [vmem:[#allocation2 + $0x38] sm:$0xff] 0.0
    $region29: #{tpu_custom_call.1} parent=1 // pred_fallthru
      _
    %v68 = vld [vmem:[#allocation3] sm:$0xff]
    %v69 = vld [vmem:[#allocation3 + $0x8] sm:$0xff]
    %v70 = vld [vmem:[#allocation3 + $0x10] sm:$0xff]
    %v71 = vld [vmem:[#allocation3 + $0x18] sm:$0xff]
    %v72 = vld [vmem:[#allocation3 + $0x20] sm:$0xff]
    %v73 = vld [vmem:[#allocation3 + $0x28] sm:$0xff]
    %v74 = vld [vmem:[#allocation3 + $0x30] sm:$0xff]
    %v75 = vld [vmem:[#allocation3 + $0x38] sm:$0xff]
    %v76 = vld [vmem:[#allocation6] sm:$0xff]
    %v77 = vld [vmem:[#allocation6 + $0x8] sm:$0xff]
    %v78 = vld [vmem:[#allocation6 + $0x10] sm:$0xff]
    %v79 = vld [vmem:[#allocation6 + $0x18] sm:$0xff]
    %v80 = vld [vmem:[#allocation6 + $0x20] sm:$0xff]
    %v81 = vld [vmem:[#allocation6 + $0x28] sm:$0xff]
    %v82 = vld [vmem:[#allocation6 + $0x30] sm:$0xff]
    %v83 = vld [vmem:[#allocation6 + $0x38] sm:$0xff]
    %v84 = vld [vmem:[#allocation6 + $0x40] sm:$0xff]
    %v85 = vld [vmem:[#allocation6 + $0x48] sm:$0xff]
    %v86 = vld [vmem:[#allocation6 + $0x50] sm:$0xff]
    %v87 = vld [vmem:[#allocation6 + $0x58] sm:$0xff]
    %v88 = vld [vmem:[#allocation6 + $0x60] sm:$0xff]
    %v89 = vld [vmem:[#allocation6 + $0x68] sm:$0xff]
    %v90 = vld [vmem:[#allocation6 + $0x70] sm:$0xff]
    %v91 = vld [vmem:[#allocation6 + $0x78] sm:$0xff]
    %v92 = vld [vmem:[#allocation6 + $0x80] sm:$0xff]
    %v93 = vld [vmem:[#allocation6 + $0x88] sm:$0xff]
    %v94 = vld [vmem:[#allocation6 + $0x90] sm:$0xff]
    %v95 = vld [vmem:[#allocation6 + $0x98] sm:$0xff]
    %v96 = vld [vmem:[#allocation6 + $0xa0] sm:$0xff]
    %v97 = vld [vmem:[#allocation6 + $0xa8] sm:$0xff]
    %v98 = vld [vmem:[#allocation6 + $0xb0] sm:$0xff]
    %v99 = vld [vmem:[#allocation6 + $0xb8] sm:$0xff]
    %v100 = vld [vmem:[#allocation6 + $0xc0] sm:$0xff]
    %v101 = vld [vmem:[#allocation6 + $0xc8] sm:$0xff]
    %v102 = vld [vmem:[#allocation6 + $0xd0] sm:$0xff]
    %v103 = vld [vmem:[#allocation6 + $0xd8] sm:$0xff]
    %v104 = vld [vmem:[#allocation6 + $0xe0] sm:$0xff]
    %v105 = vld [vmem:[#allocation6 + $0xe8] sm:$0xff]
    %v106 = vld [vmem:[#allocation6 + $0xf0] sm:$0xff]
    %v107 = vld [vmem:[#allocation6 + $0xf8] sm:$0xff]
    %v108 = vld [vmem:[#allocation6 + $0x100] sm:$0xff]
    %v109 = vld [vmem:[#allocation6 + $0x108] sm:$0xff]
    %v110 = vld [vmem:[#allocation6 + $0x110] sm:$0xff]
    %v111 = vld [vmem:[#allocation6 + $0x118] sm:$0xff]
    %v112 = vld [vmem:[#allocation6 + $0x120] sm:$0xff]
    %v113 = vld [vmem:[#allocation6 + $0x128] sm:$0xff]
    %v114 = vld [vmem:[#allocation6 + $0x130] sm:$0xff]
    %v115 = vld [vmem:[#allocation6 + $0x138] sm:$0xff]
    %v116 = vld [vmem:[#allocation6 + $0x140] sm:$0xff]
    %v117 = vld [vmem:[#allocation6 + $0x148] sm:$0xff]
    %v118 = vld [vmem:[#allocation6 + $0x150] sm:$0xff]
    %v119 = vld [vmem:[#allocation6 + $0x158] sm:$0xff]
    %v120 = vld [vmem:[#allocation6 + $0x160] sm:$0xff]
    %v121 = vld [vmem:[#allocation6 + $0x168] sm:$0xff]
    %v122 = vld [vmem:[#allocation6 + $0x170] sm:$0xff]
    %v123 = vld [vmem:[#allocation6 + $0x178] sm:$0xff]
    %v124 = vld [vmem:[#allocation6 + $0x180] sm:$0xff]
    %v125 = vld [vmem:[#allocation6 + $0x188] sm:$0xff]
    %v126 = vld [vmem:[#allocation6 + $0x190] sm:$0xff]
    %v127 = vld [vmem:[#allocation6 + $0x198] sm:$0xff]
    %v128 = vld [vmem:[#allocation6 + $0x1a0] sm:$0xff]
    %v129 = vld [vmem:[#allocation6 + $0x1a8] sm:$0xff]
    %v130 = vld [vmem:[#allocation6 + $0x1b0] sm:$0xff]
    %v131 = vld [vmem:[#allocation6 + $0x1b8] sm:$0xff]
    %v132 = vld [vmem:[#allocation6 + $0x1c0] sm:$0xff]
    %v133 = vld [vmem:[#allocation6 + $0x1c8] sm:$0xff]
    %v134 = vld [vmem:[#allocation6 + $0x1d0] sm:$0xff]
    %v135 = vld [vmem:[#allocation6 + $0x1d8] sm:$0xff]
    %v136 = vld [vmem:[#allocation6 + $0x1e0] sm:$0xff]
    %v137 = vld [vmem:[#allocation6 + $0x1e8] sm:$0xff]
    %v138 = vld [vmem:[#allocation6 + $0x1f0] sm:$0xff]
    %v139 = vld [vmem:[#allocation6 + $0x1f8] sm:$0xff]
    %v140 = vld [vmem:[#allocation6 + $0x200] sm:$0xff]
    %v141 = vld [vmem:[#allocation6 + $0x208] sm:$0xff]
    %v142 = vld [vmem:[#allocation6 + $0x210] sm:$0xff]
    %v143 = vld [vmem:[#allocation6 + $0x218] sm:$0xff]
    %v144 = vld [vmem:[#allocation6 + $0x220] sm:$0xff]
    %v145 = vld [vmem:[#allocation6 + $0x228] sm:$0xff]
    %v146 = vld [vmem:[#allocation6 + $0x230] sm:$0xff]
    %v147 = vld [vmem:[#allocation6 + $0x238] sm:$0xff]
    %v148 = vld [vmem:[#allocation6 + $0x240] sm:$0xff]
    %v149 = vld [vmem:[#allocation6 + $0x248] sm:$0xff]
    %v150 = vld [vmem:[#allocation6 + $0x250] sm:$0xff]
    %v151 = vld [vmem:[#allocation6 + $0x258] sm:$0xff]
    %v152 = vld [vmem:[#allocation6 + $0x260] sm:$0xff]
    %v153 = vld [vmem:[#allocation6 + $0x268] sm:$0xff]
    %v154 = vld [vmem:[#allocation6 + $0x270] sm:$0xff]
    %v155 = vld [vmem:[#allocation6 + $0x278] sm:$0xff]
    %v156 = vld [vmem:[#allocation6 + $0x280] sm:$0xff]
    %v157 = vld [vmem:[#allocation6 + $0x288] sm:$0xff]
    %v158 = vld [vmem:[#allocation6 + $0x290] sm:$0xff]
    %v159 = vld [vmem:[#allocation6 + $0x298] sm:$0xff]
    %v160 = vld [vmem:[#allocation6 + $0x2a0] sm:$0xff]
    %v161 = vld [vmem:[#allocation6 + $0x2a8] sm:$0xff]
    %v162 = vld [vmem:[#allocation6 + $0x2b0] sm:$0xff]
    %v163 = vld [vmem:[#allocation6 + $0x2b8] sm:$0xff]
    %v164 = vld [vmem:[#allocation6 + $0x2c0] sm:$0xff]
    %v165 = vld [vmem:[#allocation6 + $0x2c8] sm:$0xff]
    %v166 = vld [vmem:[#allocation6 + $0x2d0] sm:$0xff]
    %v167 = vld [vmem:[#allocation6 + $0x2d8] sm:$0xff]
    %v168 = vld [vmem:[#allocation6 + $0x2e0] sm:$0xff]
    %v169 = vld [vmem:[#allocation6 + $0x2e8] sm:$0xff]
    %v170 = vld [vmem:[#allocation6 + $0x2f0] sm:$0xff]
    %v171 = vld [vmem:[#allocation6 + $0x2f8] sm:$0xff]
    %v172 = vld [vmem:[#allocation6 + $0x300] sm:$0xff]
    %v173 = vld [vmem:[#allocation6 + $0x308] sm:$0xff]
    %v174 = vld [vmem:[#allocation6 + $0x310] sm:$0xff]
    %v175 = vld [vmem:[#allocation6 + $0x318] sm:$0xff]
    %v176 = vld [vmem:[#allocation6 + $0x320] sm:$0xff]
    %v177 = vld [vmem:[#allocation6 + $0x328] sm:$0xff]
    %v178 = vld [vmem:[#allocation6 + $0x330] sm:$0xff]
    %v179 = vld [vmem:[#allocation6 + $0x338] sm:$0xff]
    %v180 = vld [vmem:[#allocation6 + $0x340] sm:$0xff]
    %v181 = vld [vmem:[#allocation6 + $0x348] sm:$0xff]
    %v182 = vld [vmem:[#allocation6 + $0x350] sm:$0xff]
    %v183 = vld [vmem:[#allocation6 + $0x358] sm:$0xff]
    %v184 = vld [vmem:[#allocation6 + $0x360] sm:$0xff]
    %v185 = vld [vmem:[#allocation6 + $0x368] sm:$0xff]
    %v186 = vld [vmem:[#allocation6 + $0x370] sm:$0xff]
    %v187 = vld [vmem:[#allocation6 + $0x378] sm:$0xff]
    %v188 = vld [vmem:[#allocation6 + $0x380] sm:$0xff]
    %v189 = vld [vmem:[#allocation6 + $0x388] sm:$0xff]
    %v190 = vld [vmem:[#allocation6 + $0x390] sm:$0xff]
    %v191 = vld [vmem:[#allocation6 + $0x398] sm:$0xff]
    %v192 = vld [vmem:[#allocation6 + $0x3a0] sm:$0xff]
    %v193 = vld [vmem:[#allocation6 + $0x3a8] sm:$0xff]
    %v194 = vld [vmem:[#allocation6 + $0x3b0] sm:$0xff]
    %v195 = vld [vmem:[#allocation6 + $0x3b8] sm:$0xff]
    %v196 = vld [vmem:[#allocation6 + $0x3c0] sm:$0xff]
    %v197 = vld [vmem:[#allocation6 + $0x3c8] sm:$0xff]
    %v198 = vld [vmem:[#allocation6 + $0x3d0] sm:$0xff]
    %v199 = vld [vmem:[#allocation6 + $0x3d8] sm:$0xff]
    %v200 = vld [vmem:[#allocation6 + $0x3e0] sm:$0xff]
    %v201 = vld [vmem:[#allocation6 + $0x3e8] sm:$0xff]
    %v202 = vld [vmem:[#allocation6 + $0x3f0] sm:$0xff]
    %v203 = vld [vmem:[#allocation6 + $0x3f8] sm:$0xff]
    %204 = vmatprep.subr.mxu0 %v77
    %205 = vmatpush1.msra.mxu0 %v76
    %206 = vmatprep.subr.mxu0 %v81
    %207 = vmatpush1.msra.mxu0 %v80
    %208 = vmatprep.subr.mxu0 %v85
    %209 = vmatpush1.msra.mxu0 %v84
    %210 = vmatprep.subr.mxu0 %v89
    %211 = vmatpush1.msra.mxu0 %v88
    %212 = vmatprep.subr.mxu0 %v93
    %213 = vmatpush1.msra.mxu0 %v92
    %214 = vmatprep.subr.mxu0 %v97
    %215 = vmatpush1.msra.mxu0 %v96
    %216 = vmatprep.subr.mxu0 %v101
    %217 = vmatpush1.msra.mxu0 %v100
    %218 = vmatprep.subr.mxu0 %v105
    %219 = vmatpush1.msra.mxu0 %v104
    %220 = vmatprep.subr.mxu0 %v109
    %221 = vmatpush1.msra.mxu0 %v108
    %222 = vmatprep.subr.mxu0 %v113
    %223 = vmatpush1.msra.mxu0 %v112
    %224 = vmatprep.subr.mxu0 %v117
    %225 = vmatpush1.msra.mxu0 %v116
    %226 = vmatprep.subr.mxu0 %v121
    %227 = vmatpush1.msra.mxu0 %v120
    %228 = vmatprep.subr.mxu0 %v125
    %229 = vmatpush1.msra.mxu0 %v124
    %230 = vmatprep.subr.mxu0 %v129
    %231 = vmatpush1.msra.mxu0 %v128
    %232 = vmatprep.subr.mxu0 %v133
    %233 = vmatpush1.msra.mxu0 %v132
    %234 = vmatprep.subr.mxu0 %v137
    %235 = vmatpush1.msra.mxu0 %v136
    %236 = vmatprep.subr.mxu0 %v141
    %237 = vmatpush1.msra.mxu0 %v140
    %238 = vmatprep.subr.mxu0 %v145
    %239 = vmatpush1.msra.mxu0 %v144
    %240 = vmatprep.subr.mxu0 %v149
    %241 = vmatpush1.msra.mxu0 %v148
    %242 = vmatprep.subr.mxu0 %v153
    %243 = vmatpush1.msra.mxu0 %v152
    %244 = vmatprep.subr.mxu0 %v157
    %245 = vmatpush1.msra.mxu0 %v156
    %246 = vmatprep.subr.mxu0 %v161
    %247 = vmatpush1.msra.mxu0 %v160
    %248 = vmatprep.subr.mxu0 %v165
    %249 = vmatpush1.msra.mxu0 %v164
    %250 = vmatprep.subr.mxu0 %v169
    %251 = vmatpush1.msra.mxu0 %v168
    %252 = vmatprep.subr.mxu0 %v173
    %253 = vmatpush1.msra.mxu0 %v172
    %254 = vmatprep.subr.mxu0 %v177
    %255 = vmatpush1.msra.mxu0 %v176
    %256 = vmatprep.subr.mxu0 %v181
    %257 = vmatpush1.msra.mxu0 %v180
    %258 = vmatprep.subr.mxu0 %v185
    %259 = vmatpush1.msra.mxu0 %v184
    %260 = vmatprep.subr.mxu0 %v189
    %261 = vmatpush1.msra.mxu0 %v188
    %262 = vmatprep.subr.mxu0 %v193
    %263 = vmatpush1.msra.mxu0 %v192
    %264 = vmatprep.subr.mxu0 %v197
    %265 = vmatpush1.msra.mxu0 %v196
    %266 = vmatprep.subr.mxu0 %v201
    %267 = vmatpush1.msra.mxu0 %v200
    %268 = vmatprep.mubr.f32.mxu0 %v69
    %269 = vmatmul.mubr.f32.gmra.mrb[0].mxu0 %v68
    %v270 = vpop.f32.mrb[0].mxu0
    %v271 = vadd.f32 0.0, %v270
    %v272 = vpop.f32.mrb[0].mxu0
    %v273 = vadd.f32 0.0, %v272
    %274 = vmatprep.mubr.f32.mxu0 %v71
    %275 = vmatmul.mubr.f32.gmra.mrb[0].mxu0 %v70
    %v276 = vpop.f32.mrb[0].mxu0
    %v277 = vadd.f32 0.0, %v276
    %v278 = vpop.f32.mrb[0].mxu0
    %v279 = vadd.f32 0.0, %v278
    %280 = vmatprep.mubr.f32.mxu0 %v73
    %281 = vmatmul.mubr.f32.gmra.mrb[0].mxu0 %v72
    %v282 = vpop.f32.mrb[0].mxu0
    %v283 = vadd.f32 0.0, %v282
    %v284 = vpop.f32.mrb[0].mxu0
    %v285 = vadd.f32 0.0, %v284
    %286 = vmatprep.mubr.f32.mxu0 %v75
    %287 = vmatmul.mubr.f32.gmra.mrb[0].mxu0 %v74
    %v288 = vpop.f32.mrb[0].mxu0
    %v289 = vadd.f32 0.0, %v288
    %v290 = vpop.f32.mrb[0].mxu0
    %v291 = vadd.f32 0.0, %v290
    %292 = vdwg.mxu0
    %293 = vmatprep.subr.mxu0 %v79
    %294 = vmatpush1.msra.mxu0 %v78
    %295 = vmatprep.subr.mxu0 %v83
    %296 = vmatpush1.msra.mxu0 %v82
    %297 = vmatprep.subr.mxu0 %v87
    %298 = vmatpush1.msra.mxu0 %v86
    %299 = vmatprep.subr.mxu0 %v91
    %300 = vmatpush1.msra.mxu0 %v90
    %301 = vmatprep.subr.mxu0 %v95
    %302 = vmatpush1.msra.mxu0 %v94
    %303 = vmatprep.subr.mxu0 %v99
    %304 = vmatpush1.msra.mxu0 %v98
    %305 = vmatprep.subr.mxu0 %v103
    %306 = vmatpush1.msra.mxu0 %v102
    %307 = vmatprep.subr.mxu0 %v107
    %308 = vmatpush1.msra.mxu0 %v106
    %309 = vmatprep.subr.mxu0 %v111
    %310 = vmatpush1.msra.mxu0 %v110
    %311 = vmatprep.subr.mxu0 %v115
    %312 = vmatpush1.msra.mxu0 %v114
    %313 = vmatprep.subr.mxu0 %v119
    %314 = vmatpush1.msra.mxu0 %v118
    %315 = vmatprep.subr.mxu0 %v123
    %316 = vmatpush1.msra.mxu0 %v122
    %317 = vmatprep.subr.mxu0 %v127
    %318 = vmatpush1.msra.mxu0 %v126
    %319 = vmatprep.subr.mxu0 %v131
    %320 = vmatpush1.msra.mxu0 %v130
    %321 = vmatprep.subr.mxu0 %v135
    %322 = vmatpush1.msra.mxu0 %v134
    %323 = vmatprep.subr.mxu0 %v139
    %324 = vmatpush1.msra.mxu0 %v138
    %325 = vmatprep.subr.mxu0 %v143
    %326 = vmatpush1.msra.mxu0 %v142
    %327 = vmatprep.subr.mxu0 %v147
    %328 = vmatpush1.msra.mxu0 %v146
    %329 = vmatprep.subr.mxu0 %v151
    %330 = vmatpush1.msra.mxu0 %v150
    %331 = vmatprep.subr.mxu0 %v155
    %332 = vmatpush1.msra.mxu0 %v154
    %333 = vmatprep.subr.mxu0 %v159
    %334 = vmatpush1.msra.mxu0 %v158
    %335 = vmatprep.subr.mxu0 %v163
    %336 = vmatpush1.msra.mxu0 %v162
    %337 = vmatprep.subr.mxu0 %v167
    %338 = vmatpush1.msra.mxu0 %v166
    %339 = vmatprep.subr.mxu0 %v171
    %340 = vmatpush1.msra.mxu0 %v170
    %341 = vmatprep.subr.mxu0 %v175
    %342 = vmatpush1.msra.mxu0 %v174
    %343 = vmatprep.subr.mxu0 %v179
    %344 = vmatpush1.msra.mxu0 %v178
    %345 = vmatprep.subr.mxu0 %v183
    %346 = vmatpush1.msra.mxu0 %v182
    %347 = vmatprep.subr.mxu0 %v187
    %348 = vmatpush1.msra.mxu0 %v186
    %349 = vmatprep.subr.mxu0 %v191
    %350 = vmatpush1.msra.mxu0 %v190
    %351 = vmatprep.subr.mxu0 %v195
    %352 = vmatpush1.msra.mxu0 %v194
    %353 = vmatprep.subr.mxu0 %v199
    %354 = vmatpush1.msra.mxu0 %v198
    %355 = vmatprep.subr.mxu0 %v203
    %356 = vmatpush1.msra.mxu0 %v202
    %357 = vmatprep.mubr.f32.mxu0 %v69
    %358 = vmatmul.mubr.f32.gmra.mrb[0].mxu0 %v68
    %v359 = vpop.f32.mrb[0].mxu0
    %v360 = vadd.f32 0.0, %v359
    %v361 = vpop.f32.mrb[0].mxu0
    %v362 = vadd.f32 0.0, %v361
    %363 = vmatprep.mubr.f32.mxu0 %v71
    %364 = vmatmul.mubr.f32.gmra.mrb[0].mxu0 %v70
    %v365 = vpop.f32.mrb[0].mxu0
    %v366 = vadd.f32 0.0, %v365
    %v367 = vpop.f32.mrb[0].mxu0
    %v368 = vadd.f32 0.0, %v367
    %369 = vmatprep.mubr.f32.mxu0 %v73
    %370 = vmatmul.mubr.f32.gmra.mrb[0].mxu0 %v72
    %v371 = vpop.f32.mrb[0].mxu0
    %v372 = vadd.f32 0.0, %v371
    %v373 = vpop.f32.mrb[0].mxu0
    %v374 = vadd.f32 0.0, %v373
    %375 = vmatprep.mubr.f32.mxu0 %v75
    %376 = vmatmul.mubr.f32.gmra.mrb[0].mxu0 %v74
    %v377 = vpop.f32.mrb[0].mxu0
    %v378 = vadd.f32 0.0, %v377
    %v379 = vpop.f32.mrb[0].mxu0
    %v380 = vadd.f32 0.0, %v379
    %381 = vdwg.mxu0
    %v382 = vxor.u32 %v271, 2147483648
    %v383 = vxor.u32 %v273, 2147483648
    %v384 = vxor.u32 %v360, 2147483648
    %v385 = vxor.u32 %v362, 2147483648
    %v386 = vxor.u32 %v277, 2147483648
    %v387 = vxor.u32 %v279, 2147483648
    %v388 = vxor.u32 %v366, 2147483648
    %v389 = vxor.u32 %v368, 2147483648
    %v390 = vxor.u32 %v283, 2147483648
    %v391 = vxor.u32 %v285, 2147483648
    %v392 = vxor.u32 %v372, 2147483648
    %v393 = vxor.u32 %v374, 2147483648
    %v394 = vxor.u32 %v289, 2147483648
    %v395 = vxor.u32 %v291, 2147483648
    %v396 = vxor.u32 %v378, 2147483648
    %v397 = vxor.u32 %v380, 2147483648
    %v398 = vmul.f32 %v382, 1.442695
    %v399 = vpow.pop %v398
    %v400 = vmul.f32 %v383, 1.442695
    %v401 = vpow.pop %v400
    %v402 = vmul.f32 %v384, 1.442695
    %v403 = vpow.pop %v402
    %v404 = vmul.f32 %v385, 1.442695
    %v405 = vpow.pop %v404
    %v406 = vmul.f32 %v386, 1.442695
    %v407 = vpow.pop %v406
    %v408 = vmul.f32 %v387, 1.442695
    %v409 = vpow.pop %v408
    %v410 = vmul.f32 %v388, 1.442695
    %v411 = vpow.pop %v410
    %v412 = vmul.f32 %v389, 1.442695
    %v413 = vpow.pop %v412
    %v414 = vmul.f32 %v390, 1.442695
    %v415 = vpow.pop %v414
    %v416 = vmul.f32 %v391, 1.442695
    %v417 = vpow.pop %v416
    %v418 = vmul.f32 %v392, 1.442695
    %v419 = vpow.pop %v418
    %v420 = vmul.f32 %v393, 1.442695
    %v421 = vpow.pop %v420
    %v422 = vmul.f32 %v394, 1.442695
    %v423 = vpow.pop %v422
    %v424 = vmul.f32 %v395, 1.442695
    %v425 = vpow.pop %v424
    %v426 = vmul.f32 %v396, 1.442695
    %v427 = vpow.pop %v426
    %v428 = vmul.f32 %v397, 1.442695
    %v429 = vpow.pop %v428
    %v430 = vadd.f32 %v399, 1.0
    %v431 = vadd.f32 %v401, 1.0
    %v432 = vadd.f32 %v403, 1.0
    %v433 = vadd.f32 %v405, 1.0
    %v434 = vadd.f32 %v407, 1.0
    %v435 = vadd.f32 %v409, 1.0
    %v436 = vadd.f32 %v411, 1.0
    %v437 = vadd.f32 %v413, 1.0
    %v438 = vadd.f32 %v415, 1.0
    %v439 = vadd.f32 %v417, 1.0
    %v440 = vadd.f32 %v419, 1.0
    %v441 = vadd.f32 %v421, 1.0
    %v442 = vadd.f32 %v423, 1.0
    %v443 = vadd.f32 %v425, 1.0
    %v444 = vadd.f32 %v427, 1.0
    %v445 = vadd.f32 %v429, 1.0
    %v446 = vrcp.pop %v430
    %v447 = vmul.f32 1.0, %v446
    %v448 = vrcp.pop %v431
    %v449 = vmul.f32 1.0, %v448
    %v450 = vrcp.pop %v432
    %v451 = vmul.f32 1.0, %v450
    %v452 = vrcp.pop %v433
    %v453 = vmul.f32 1.0, %v452
    %v454 = vrcp.pop %v434
    %v455 = vmul.f32 1.0, %v454
    %v456 = vrcp.pop %v435
    %v457 = vmul.f32 1.0, %v456
    %v458 = vrcp.pop %v436
    %v459 = vmul.f32 1.0, %v458
    %v460 = vrcp.pop %v437
    %v461 = vmul.f32 1.0, %v460
    %v462 = vrcp.pop %v438
    %v463 = vmul.f32 1.0, %v462
    %v464 = vrcp.pop %v439
    %v465 = vmul.f32 1.0, %v464
    %v466 = vrcp.pop %v440
    %v467 = vmul.f32 1.0, %v466
    %v468 = vrcp.pop %v441
    %v469 = vmul.f32 1.0, %v468
    %v470 = vrcp.pop %v442
    %v471 = vmul.f32 1.0, %v470
    %v472 = vrcp.pop %v443
    %v473 = vmul.f32 1.0, %v472
    %v474 = vrcp.pop %v444
    %v475 = vmul.f32 1.0, %v474
    %v476 = vrcp.pop %v445
    %v477 = vmul.f32 1.0, %v476
    %v478 = vmul.f32 %v271, %v447
    %v479 = vmul.f32 %v273, %v449
    %v480 = vmul.f32 %v360, %v451
    %v481 = vmul.f32 %v362, %v453
    %v482 = vmul.f32 %v277, %v455
    %v483 = vmul.f32 %v279, %v457
    %v484 = vmul.f32 %v366, %v459
    %v485 = vmul.f32 %v368, %v461
    %v486 = vmul.f32 %v283, %v463
    %v487 = vmul.f32 %v285, %v465
    %v488 = vmul.f32 %v372, %v467
    %v489 = vmul.f32 %v374, %v469
    %v490 = vmul.f32 %v289, %v471
    %v491 = vmul.f32 %v291, %v473
    %v492 = vmul.f32 %v378, %v475
    %v493 = vmul.f32 %v380, %v477
    %v494 = vld [vmem:[#allocation2] sm:$0xff]
    %v495 = vld [vmem:[#allocation2 + $0x8] sm:$0xff]
    %v496 = vld [vmem:[#allocation2 + $0x10] sm:$0xff]
    %v497 = vld [vmem:[#allocation2 + $0x18] sm:$0xff]
    %v498 = vld [vmem:[#allocation2 + $0x20] sm:$0xff]
    %v499 = vld [vmem:[#allocation2 + $0x28] sm:$0xff]
    %v500 = vld [vmem:[#allocation2 + $0x30] sm:$0xff]
    %v501 = vld [vmem:[#allocation2 + $0x38] sm:$0xff]
    %v502 = vld [vmem:[#allocation8] sm:$0xff]
    %v503 = vld [vmem:[#allocation8 + $0x8] sm:$0xff]
    %v504 = vld [vmem:[#allocation8 + $0x10] sm:$0xff]
    %v505 = vld [vmem:[#allocation8 + $0x18] sm:$0xff]
    %v506 = vld [vmem:[#allocation8 + $0x20] sm:$0xff]
    %v507 = vld [vmem:[#allocation8 + $0x28] sm:$0xff]
    %v508 = vld [vmem:[#allocation8 + $0x30] sm:$0xff]
    %v509 = vld [vmem:[#allocation8 + $0x38] sm:$0xff]
    %v510 = vld [vmem:[#allocation8 + $0x40] sm:$0xff]
    %v511 = vld [vmem:[#allocation8 + $0x48] sm:$0xff]
    %v512 = vld [vmem:[#allocation8 + $0x50] sm:$0xff]
    %v513 = vld [vmem:[#allocation8 + $0x58] sm:$0xff]
    %v514 = vld [vmem:[#allocation8 + $0x60] sm:$0xff]
    %v515 = vld [vmem:[#allocation8 + $0x68] sm:$0xff]
    %v516 = vld [vmem:[#allocation8 + $0x70] sm:$0xff]
    %v517 = vld [vmem:[#allocation8 + $0x78] sm:$0xff]
    %v518 = vld [vmem:[#allocation8 + $0x80] sm:$0xff]
    %v519 = vld [vmem:[#allocation8 + $0x88] sm:$0xff]
    %v520 = vld [vmem:[#allocation8 + $0x90] sm:$0xff]
    %v521 = vld [vmem:[#allocation8 + $0x98] sm:$0xff]
    %v522 = vld [vmem:[#allocation8 + $0xa0] sm:$0xff]
    %v523 = vld [vmem:[#allocation8 + $0xa8] sm:$0xff]
    %v524 = vld [vmem:[#allocation8 + $0xb0] sm:$0xff]
    %v525 = vld [vmem:[#allocation8 + $0xb8] sm:$0xff]
    %v526 = vld [vmem:[#allocation8 + $0xc0] sm:$0xff]
    %v527 = vld [vmem:[#allocation8 + $0xc8] sm:$0xff]
    %v528 = vld [vmem:[#allocation8 + $0xd0] sm:$0xff]
    %v529 = vld [vmem:[#allocation8 + $0xd8] sm:$0xff]
    %v530 = vld [vmem:[#allocation8 + $0xe0] sm:$0xff]
    %v531 = vld [vmem:[#allocation8 + $0xe8] sm:$0xff]
    %v532 = vld [vmem:[#allocation8 + $0xf0] sm:$0xff]
    %v533 = vld [vmem:[#allocation8 + $0xf8] sm:$0xff]
    %v534 = vld [vmem:[#allocation8 + $0x100] sm:$0xff]
    %v535 = vld [vmem:[#allocation8 + $0x108] sm:$0xff]
    %v536 = vld [vmem:[#allocation8 + $0x110] sm:$0xff]
    %v537 = vld [vmem:[#allocation8 + $0x118] sm:$0xff]
    %v538 = vld [vmem:[#allocation8 + $0x120] sm:$0xff]
    %v539 = vld [vmem:[#allocation8 + $0x128] sm:$0xff]
    %v540 = vld [vmem:[#allocation8 + $0x130] sm:$0xff]
    %v541 = vld [vmem:[#allocation8 + $0x138] sm:$0xff]
    %v542 = vld [vmem:[#allocation8 + $0x140] sm:$0xff]
    %v543 = vld [vmem:[#allocation8 + $0x148] sm:$0xff]
    %v544 = vld [vmem:[#allocation8 + $0x150] sm:$0xff]
    %v545 = vld [vmem:[#allocation8 + $0x158] sm:$0xff]
    %v546 = vld [vmem:[#allocation8 + $0x160] sm:$0xff]
    %v547 = vld [vmem:[#allocation8 + $0x168] sm:$0xff]
    %v548 = vld [vmem:[#allocation8 + $0x170] sm:$0xff]
    %v549 = vld [vmem:[#allocation8 + $0x178] sm:$0xff]
    %v550 = vld [vmem:[#allocation8 + $0x180] sm:$0xff]
    %v551 = vld [vmem:[#allocation8 + $0x188] sm:$0xff]
    %v552 = vld [vmem:[#allocation8 + $0x190] sm:$0xff]
    %v553 = vld [vmem:[#allocation8 + $0x198] sm:$0xff]
    %v554 = vld [vmem:[#allocation8 + $0x1a0] sm:$0xff]
    %v555 = vld [vmem:[#allocation8 + $0x1a8] sm:$0xff]
    %v556 = vld [vmem:[#allocation8 + $0x1b0] sm:$0xff]
    %v557 = vld [vmem:[#allocation8 + $0x1b8] sm:$0xff]
    %v558 = vld [vmem:[#allocation8 + $0x1c0] sm:$0xff]
    %v559 = vld [vmem:[#allocation8 + $0x1c8] sm:$0xff]
    %v560 = vld [vmem:[#allocation8 + $0x1d0] sm:$0xff]
    %v561 = vld [vmem:[#allocation8 + $0x1d8] sm:$0xff]
    %v562 = vld [vmem:[#allocation8 + $0x1e0] sm:$0xff]
    %v563 = vld [vmem:[#allocation8 + $0x1e8] sm:$0xff]
    %v564 = vld [vmem:[#allocation8 + $0x1f0] sm:$0xff]
    %v565 = vld [vmem:[#allocation8 + $0x1f8] sm:$0xff]
    %v566 = vld [vmem:[#allocation8 + $0x200] sm:$0xff]
    %v567 = vld [vmem:[#allocation8 + $0x208] sm:$0xff]
    %v568 = vld [vmem:[#allocation8 + $0x210] sm:$0xff]
    %v569 = vld [vmem:[#allocation8 + $0x218] sm:$0xff]
    %v570 = vld [vmem:[#allocation8 + $0x220] sm:$0xff]
    %v571 = vld [vmem:[#allocation8 + $0x228] sm:$0xff]
    %v572 = vld [vmem:[#allocation8 + $0x230] sm:$0xff]
    %v573 = vld [vmem:[#allocation8 + $0x238] sm:$0xff]
    %v574 = vld [vmem:[#allocation8 + $0x240] sm:$0xff]
    %v575 = vld [vmem:[#allocation8 + $0x248] sm:$0xff]
    %v576 = vld [vmem:[#allocation8 + $0x250] sm:$0xff]
    %v577 = vld [vmem:[#allocation8 + $0x258] sm:$0xff]
    %v578 = vld [vmem:[#allocation8 + $0x260] sm:$0xff]
    %v579 = vld [vmem:[#allocation8 + $0x268] sm:$0xff]
    %v580 = vld [vmem:[#allocation8 + $0x270] sm:$0xff]
    %v581 = vld [vmem:[#allocation8 + $0x278] sm:$0xff]
    %v582 = vld [vmem:[#allocation8 + $0x280] sm:$0xff]
    %v583 = vld [vmem:[#allocation8 + $0x288] sm:$0xff]
    %v584 = vld [vmem:[#allocation8 + $0x290] sm:$0xff]
    %v585 = vld [vmem:[#allocation8 + $0x298] sm:$0xff]
    %v586 = vld [vmem:[#allocation8 + $0x2a0] sm:$0xff]
    %v587 = vld [vmem:[#allocation8 + $0x2a8] sm:$0xff]
    %v588 = vld [vmem:[#allocation8 + $0x2b0] sm:$0xff]
    %v589 = vld [vmem:[#allocation8 + $0x2b8] sm:$0xff]
    %v590 = vld [vmem:[#allocation8 + $0x2c0] sm:$0xff]
    %v591 = vld [vmem:[#allocation8 + $0x2c8] sm:$0xff]
    %v592 = vld [vmem:[#allocation8 + $0x2d0] sm:$0xff]
    %v593 = vld [vmem:[#allocation8 + $0x2d8] sm:$0xff]
    %v594 = vld [vmem:[#allocation8 + $0x2e0] sm:$0xff]
    %v595 = vld [vmem:[#allocation8 + $0x2e8] sm:$0xff]
    %v596 = vld [vmem:[#allocation8 + $0x2f0] sm:$0xff]
    %v597 = vld [vmem:[#allocation8 + $0x2f8] sm:$0xff]
    %v598 = vld [vmem:[#allocation8 + $0x300] sm:$0xff]
    %v599 = vld [vmem:[#allocation8 + $0x308] sm:$0xff]
    %v600 = vld [vmem:[#allocation8 + $0x310] sm:$0xff]
    %v601 = vld [vmem:[#allocation8 + $0x318] sm:$0xff]
    %v602 = vld [vmem:[#allocation8 + $0x320] sm:$0xff]
    %v603 = vld [vmem:[#allocation8 + $0x328] sm:$0xff]
    %v604 = vld [vmem:[#allocation8 + $0x330] sm:$0xff]
    %v605 = vld [vmem:[#allocation8 + $0x338] sm:$0xff]
    %v606 = vld [vmem:[#allocation8 + $0x340] sm:$0xff]
    %v607 = vld [vmem:[#allocation8 + $0x348] sm:$0xff]
    %v608 = vld [vmem:[#allocation8 + $0x350] sm:$0xff]
    %v609 = vld [vmem:[#allocation8 + $0x358] sm:$0xff]
    %v610 = vld [vmem:[#allocation8 + $0x360] sm:$0xff]
    %v611 = vld [vmem:[#allocation8 + $0x368] sm:$0xff]
    %v612 = vld [vmem:[#allocation8 + $0x370] sm:$0xff]
    %v613 = vld [vmem:[#allocation8 + $0x378] sm:$0xff]
    %v614 = vld [vmem:[#allocation8 + $0x380] sm:$0xff]
    %v615 = vld [vmem:[#allocation8 + $0x388] sm:$0xff]
    %v616 = vld [vmem:[#allocation8 + $0x390] sm:$0xff]
    %v617 = vld [vmem:[#allocation8 + $0x398] sm:$0xff]
    %v618 = vld [vmem:[#allocation8 + $0x3a0] sm:$0xff]
    %v619 = vld [vmem:[#allocation8 + $0x3a8] sm:$0xff]
    %v620 = vld [vmem:[#allocation8 + $0x3b0] sm:$0xff]
    %v621 = vld [vmem:[#allocation8 + $0x3b8] sm:$0xff]
    %v622 = vld [vmem:[#allocation8 + $0x3c0] sm:$0xff]
    %v623 = vld [vmem:[#allocation8 + $0x3c8] sm:$0xff]
    %v624 = vld [vmem:[#allocation8 + $0x3d0] sm:$0xff]
    %v625 = vld [vmem:[#allocation8 + $0x3d8] sm:$0xff]
    %v626 = vld [vmem:[#allocation8 + $0x3e0] sm:$0xff]
    %v627 = vld [vmem:[#allocation8 + $0x3e8] sm:$0xff]
    %v628 = vld [vmem:[#allocation8 + $0x3f0] sm:$0xff]
    %v629 = vld [vmem:[#allocation8 + $0x3f8] sm:$0xff]
    %630 = vmatprep.subr.mxu0 %v503
    %631 = vmatpush1.msra.mxu0 %v502
    %632 = vmatprep.subr.mxu0 %v505
    %633 = vmatpush1.msra.mxu0 %v504
    %634 = vmatprep.subr.mxu0 %v507
    %635 = vmatpush1.msra.mxu0 %v506
    %636 = vmatprep.subr.mxu0 %v509
    %637 = vmatpush1.msra.mxu0 %v508
    %638 = vmatprep.subr.mxu0 %v511
    %639 = vmatpush1.msra.mxu0 %v510
    %640 = vmatprep.subr.mxu0 %v513
    %641 = vmatpush1.msra.mxu0 %v512
    %642 = vmatprep.subr.mxu0 %v515
    %643 = vmatpush1.msra.mxu0 %v514
    %644 = vmatprep.subr.mxu0 %v517
    %645 = vmatpush1.msra.mxu0 %v516
    %646 = vmatprep.subr.mxu0 %v519
    %647 = vmatpush1.msra.mxu0 %v518
    %648 = vmatprep.subr.mxu0 %v521
    %649 = vmatpush1.msra.mxu0 %v520
    %650 = vmatprep.subr.mxu0 %v523
    %651 = vmatpush1.msra.mxu0 %v522
    %652 = vmatprep.subr.mxu0 %v525
    %653 = vmatpush1.msra.mxu0 %v524
    %654 = vmatprep.subr.mxu0 %v527
    %655 = vmatpush1.msra.mxu0 %v526
    %656 = vmatprep.subr.mxu0 %v529
    %657 = vmatpush1.msra.mxu0 %v528
    %658 = vmatprep.subr.mxu0 %v531
    %659 = vmatpush1.msra.mxu0 %v530
    %660 = vmatprep.subr.mxu0 %v533
    %661 = vmatpush1.msra.mxu0 %v532
    %662 = vmatprep.subr.mxu0 %v535
    %663 = vmatpush1.msra.mxu0 %v534
    %664 = vmatprep.subr.mxu0 %v537
    %665 = vmatpush1.msra.mxu0 %v536
    %666 = vmatprep.subr.mxu0 %v539
    %667 = vmatpush1.msra.mxu0 %v538
    %668 = vmatprep.subr.mxu0 %v541
    %669 = vmatpush1.msra.mxu0 %v540
    %670 = vmatprep.subr.mxu0 %v543
    %671 = vmatpush1.msra.mxu0 %v542
    %672 = vmatprep.subr.mxu0 %v545
    %673 = vmatpush1.msra.mxu0 %v544
    %674 = vmatprep.subr.mxu0 %v547
    %675 = vmatpush1.msra.mxu0 %v546
    %676 = vmatprep.subr.mxu0 %v549
    %677 = vmatpush1.msra.mxu0 %v548
    %678 = vmatprep.subr.mxu0 %v551
    %679 = vmatpush1.msra.mxu0 %v550
    %680 = vmatprep.subr.mxu0 %v553
    %681 = vmatpush1.msra.mxu0 %v552
    %682 = vmatprep.subr.mxu0 %v555
    %683 = vmatpush1.msra.mxu0 %v554
    %684 = vmatprep.subr.mxu0 %v557
    %685 = vmatpush1.msra.mxu0 %v556
    %686 = vmatprep.subr.mxu0 %v559
    %687 = vmatpush1.msra.mxu0 %v558
    %688 = vmatprep.subr.mxu0 %v561
    %689 = vmatpush1.msra.mxu0 %v560
    %690 = vmatprep.subr.mxu0 %v563
    %691 = vmatpush1.msra.mxu0 %v562
    %692 = vmatprep.subr.mxu0 %v565
    %693 = vmatpush1.msra.mxu0 %v564
    %694 = vmatprep.mubr.f32.mxu0 %v479
    %695 = vmatmul.mubr.f32.gmra.mrb[0].mxu0 %v478
    %v696 = vpop.f32.mrb[0].mxu0
    %v697 = vadd.f32 0.0, %v696
    %v698 = vpop.f32.mrb[0].mxu0
    %v699 = vadd.f32 0.0, %v698
    %700 = vmatprep.mubr.f32.mxu0 %v483
    %701 = vmatmul.mubr.f32.gmra.mrb[0].mxu0 %v482
    %v702 = vpop.f32.mrb[0].mxu0
    %v703 = vadd.f32 0.0, %v702
    %v704 = vpop.f32.mrb[0].mxu0
    %v705 = vadd.f32 0.0, %v704
    %706 = vmatprep.mubr.f32.mxu0 %v487
    %707 = vmatmul.mubr.f32.gmra.mrb[0].mxu0 %v486
    %v708 = vpop.f32.mrb[0].mxu0
    %v709 = vadd.f32 0.0, %v708
    %v710 = vpop.f32.mrb[0].mxu0
    %v711 = vadd.f32 0.0, %v710
    %712 = vmatprep.mubr.f32.mxu0 %v491
    %713 = vmatmul.mubr.f32.gmra.mrb[0].mxu0 %v490
    %v714 = vpop.f32.mrb[0].mxu0
    %v715 = vadd.f32 0.0, %v714
    %v716 = vpop.f32.mrb[0].mxu0
    %v717 = vadd.f32 0.0, %v716
    %718 = vdwg.mxu0
    %719 = vmatprep.subr.mxu0 %v567
    %720 = vmatpush1.msra.mxu0 %v566
    %721 = vmatprep.subr.mxu0 %v569
    %722 = vmatpush1.msra.mxu0 %v568
    %723 = vmatprep.subr.mxu0 %v571
    %724 = vmatpush1.msra.mxu0 %v570
    %725 = vmatprep.subr.mxu0 %v573
    %726 = vmatpush1.msra.mxu0 %v572
    %727 = vmatprep.subr.mxu0 %v575
    %728 = vmatpush1.msra.mxu0 %v574
    %729 = vmatprep.subr.mxu0 %v577
    %730 = vmatpush1.msra.mxu0 %v576
    %731 = vmatprep.subr.mxu0 %v579
    %732 = vmatpush1.msra.mxu0 %v578
    %733 = vmatprep.subr.mxu0 %v581
    %734 = vmatpush1.msra.mxu0 %v580
    %735 = vmatprep.subr.mxu0 %v583
    %736 = vmatpush1.msra.mxu0 %v582
    %737 = vmatprep.subr.mxu0 %v585
    %738 = vmatpush1.msra.mxu0 %v584
    %739 = vmatprep.subr.mxu0 %v587
    %740 = vmatpush1.msra.mxu0 %v586
    %741 = vmatprep.subr.mxu0 %v589
    %742 = vmatpush1.msra.mxu0 %v588
    %743 = vmatprep.subr.mxu0 %v591
    %744 = vmatpush1.msra.mxu0 %v590
    %745 = vmatprep.subr.mxu0 %v593
    %746 = vmatpush1.msra.mxu0 %v592
    %747 = vmatprep.subr.mxu0 %v595
    %748 = vmatpush1.msra.mxu0 %v594
    %749 = vmatprep.subr.mxu0 %v597
    %750 = vmatpush1.msra.mxu0 %v596
    %751 = vmatprep.subr.mxu0 %v599
    %752 = vmatpush1.msra.mxu0 %v598
    %753 = vmatprep.subr.mxu0 %v601
    %754 = vmatpush1.msra.mxu0 %v600
    %755 = vmatprep.subr.mxu0 %v603
    %756 = vmatpush1.msra.mxu0 %v602
    %757 = vmatprep.subr.mxu0 %v605
    %758 = vmatpush1.msra.mxu0 %v604
    %759 = vmatprep.subr.mxu0 %v607
    %760 = vmatpush1.msra.mxu0 %v606
    %761 = vmatprep.subr.mxu0 %v609
    %762 = vmatpush1.msra.mxu0 %v608
    %763 = vmatprep.subr.mxu0 %v611
    %764 = vmatpush1.msra.mxu0 %v610
    %765 = vmatprep.subr.mxu0 %v613
    %766 = vmatpush1.msra.mxu0 %v612
    %767 = vmatprep.subr.mxu0 %v615
    %768 = vmatpush1.msra.mxu0 %v614
    %769 = vmatprep.subr.mxu0 %v617
    %770 = vmatpush1.msra.mxu0 %v616
    %771 = vmatprep.subr.mxu0 %v619
    %772 = vmatpush1.msra.mxu0 %v618
    %773 = vmatprep.subr.mxu0 %v621
    %774 = vmatpush1.msra.mxu0 %v620
    %775 = vmatprep.subr.mxu0 %v623
    %776 = vmatpush1.msra.mxu0 %v622
    %777 = vmatprep.subr.mxu0 %v625
    %778 = vmatpush1.msra.mxu0 %v624
    %779 = vmatprep.subr.mxu0 %v627
    %780 = vmatpush1.msra.mxu0 %v626
    %781 = vmatprep.subr.mxu0 %v629
    %782 = vmatpush1.msra.mxu0 %v628
    %783 = vmatprep.mubr.f32.mxu0 %v481
    %784 = vmatmul.mubr.f32.gmra.mrb[0].mxu0 %v480
    %v785 = vpop.f32.mrb[0].mxu0
    %v786 = vadd.f32 %v697, %v785
    %v787 = vpop.f32.mrb[0].mxu0
    %v788 = vadd.f32 %v699, %v787
    %789 = vmatprep.mubr.f32.mxu0 %v485
    %790 = vmatmul.mubr.f32.gmra.mrb[0].mxu0 %v484
    %v791 = vpop.f32.mrb[0].mxu0
    %v792 = vadd.f32 %v703, %v791
    %v793 = vpop.f32.mrb[0].mxu0
    %v794 = vadd.f32 %v705, %v793
    %795 = vmatprep.mubr.f32.mxu0 %v489
    %796 = vmatmul.mubr.f32.gmra.mrb[0].mxu0 %v488
    %v797 = vpop.f32.mrb[0].mxu0
    %v798 = vadd.f32 %v709, %v797
    %v799 = vpop.f32.mrb[0].mxu0
    %v800 = vadd.f32 %v711, %v799
    %801 = vmatprep.mubr.f32.mxu0 %v493
    %802 = vmatmul.mubr.f32.gmra.mrb[0].mxu0 %v492
    %v803 = vpop.f32.mrb[0].mxu0
    %v804 = vadd.f32 %v715, %v803
    %v805 = vpop.f32.mrb[0].mxu0
    %v806 = vadd.f32 %v717, %v805
    %807 = vdwg.mxu0
    %v808 = vadd.f32 %v494, %v786
    %v809 = vadd.f32 %v495, %v788
    %v810 = vadd.f32 %v496, %v792
    %v811 = vadd.f32 %v497, %v794
    %v812 = vadd.f32 %v498, %v798
    %v813 = vadd.f32 %v499, %v800
    %v814 = vadd.f32 %v500, %v804
    %v815 = vadd.f32 %v501, %v806
    %816 = vst [vmem:[#allocation2] sm:$0xff] %v808
    %817 = vst [vmem:[#allocation2 + $0x8] sm:$0xff] %v809
    %818 = vst [vmem:[#allocation2 + $0x10] sm:$0xff] %v810
    %819 = vst [vmem:[#allocation2 + $0x18] sm:$0xff] %v811
    %820 = vst [vmem:[#allocation2 + $0x20] sm:$0xff] %v812
    %821 = vst [vmem:[#allocation2 + $0x28] sm:$0xff] %v813
    %822 = vst [vmem:[#allocation2 + $0x30] sm:$0xff] %v814
    %823 = vst [vmem:[#allocation2 + $0x38] sm:$0xff] %v815
    // Predicated region
    $region30: #{tpu_custom_call.1} parent=1 // pred_check
      %p824 = pneg %p56
    $region31: #{tpu_custom_call.1} parent=1 // pred_check_branch
      %826 = sbr.rel (%p824) target = $region33
    $region32: #{tpu_custom_call.1} parent=1 // pred_region
      %v827 = vld [vmem:[#allocation2] sm:$0xff]
      %v828 = vld [vmem:[#allocation2 + $0x8] sm:$0xff]
      %v829 = vld [vmem:[#allocation2 + $0x10] sm:$0xff]
      %v830 = vld [vmem:[#allocation2 + $0x18] sm:$0xff]
      %v831 = vld [vmem:[#allocation2 + $0x20] sm:$0xff]
      %v832 = vld [vmem:[#allocation2 + $0x28] sm:$0xff]
      %v833 = vld [vmem:[#allocation2 + $0x30] sm:$0xff]
      %v834 = vld [vmem:[#allocation2 + $0x38] sm:$0xff]
      %835 = vst [vmem:[#allocation9] sm:$0xff] %v827
      %836 = vst [vmem:[#allocation9 + $0x8] sm:$0xff] %v828
      %837 = vst [vmem:[#allocation9 + $0x10] sm:$0xff] %v829
      %838 = vst [vmem:[#allocation9 + $0x18] sm:$0xff] %v830
      %839 = vst [vmem:[#allocation9 + $0x20] sm:$0xff] %v831
      %840 = vst [vmem:[#allocation9 + $0x28] sm:$0xff] %v832
      %841 = vst [vmem:[#allocation9 + $0x30] sm:$0xff] %v833
      %842 = vst [vmem:[#allocation9 + $0x38] sm:$0xff] %v834
    $region33: #{tpu_custom_call.1} parent=1 // pred_fallthru
      _
    // Predicated region
    $region34: #{tpu_custom_call.1} parent=1 // pred_check
      _
    $region35: #{tpu_custom_call.1} parent=1 // pred_check_branch
      %844 = sbr.rel (0) target = $region37
    $region36: #{tpu_custom_call.1} parent=1 // pred_region
      %s846 = ssub.s32 1024, 1024
      %847 = vsyncadd [#allocation5], %s846
      %s848 = sshll.u32 [#allocation9], 4
      %s849 = int_to_ptr.vmem [resolvable:$true] %s848
      %854 = dma.vmem_to_hbm [thread:$0]  %s849, 1024, %s3, [#allocation5], 256, 256, 16
    $region37: #{tpu_custom_call.1} parent=1 // pred_fallthru
      _
    // Predicated region
    $region38: #{tpu_custom_call.1} parent=1 // pred_check
      _
    $region39: #{tpu_custom_call.1} parent=1 // pred_check_branch
      %856 = sbr.rel (0) target = $region41
    $region40: #{tpu_custom_call.1} parent=1 // pred_region
      %857 = dma.done [#allocation5], 1024
    $region41: #{tpu_custom_call.1} parent=1 // pred_fallthru
      _
    %858 = vsyncpa [#allocation4], 1
    %859 = vsyncpa [#allocation7], 1
    %860 = vsyncpa [#allocation5], 1

</llo_original>
